<compile_context>
chip_gen: v6e
topology: v6e:2x2x1
jax: 0.10.0
libtpu: 0.0.40
codegen_flags: <defaults>
</compile_context>

<pallas_src>
import jax
import jax.numpy as jnp
from jax.experimental import pallas as pl
from jax.experimental.pallas import tpu as pltpu

_LANES = 128           # output last dim is a full lane width -> unmasked vst
_MAX_TILE_ROWS = 1024  # 2 * (1 + 3) * 1024 * 128 * 4 B = 4 MiB working set


def _replicate_kernel(x_ref, o_ref):
    # x_ref: (TR, 128) tile of the single input channel, original dtype
    # o_ref: (3, TR, 128) tile of the output, float32
    v = x_ref[...].astype(o_ref.dtype)
    o_ref[...] = jnp.broadcast_to(v[None], o_ref.shape)


def resize_channel_to_3(img):
    """img: [1, H, W] array -> [3, H, W] float32 (channel replication)."""
    assert img.ndim == 3 and img.shape[0] == 1, "expected [1, H, W] input"
    _, H, W = img.shape
    n = H * W

    # Flatten pixels into a lane-dense (rows, 128) slab, padding only the tail.
    rows = pl.cdiv(n, _LANES)
    # Row tile: full (padded-to-8) extent for small images, else 1024-row tiles.
    tr = min(((rows + 7) // 8) * 8, _MAX_TILE_ROWS)
    rows_pad = ((rows + tr - 1) // tr) * tr
    pad = rows_pad * _LANES - n

    x = img.reshape(-1)
    if pad:
        x = jnp.pad(x, (0, pad))
    x = x.reshape(rows_pad, _LANES)

    out = pl.pallas_call(
        _replicate_kernel,
        out_shape=jax.ShapeDtypeStruct((3, rows_pad, _LANES), jnp.float32),
        grid_spec=pltpu.PrefetchScalarGridSpec(
            num_scalar_prefetch=0,
            grid=(rows_pad // tr,),                      # tile over slab rows
            in_specs=[
                pl.BlockSpec((tr, _LANES), lambda i: (i, 0)),
            ],
            out_specs=pl.BlockSpec((3, tr, _LANES), lambda i: (0, i, 0)),
        ),
        compiler_params=pltpu.CompilerParams(
            dimension_semantics=("parallel",),           # balanced megacore split
        ),
        cost_estimate=pl.CostEstimate(
            flops=0,
            transcendentals=0,
            bytes_accessed=n * img.dtype.itemsize + 3 * n * 4,
        ),
    )(x)

    # Undo the lane-dense packing: (3, rows_pad, 128) -> (3, H, W).
    # When pad == 0 this is a pure reshape (no copy).
    return out.reshape(3, rows_pad * _LANES)[:, :n].reshape(3, H, W)


if __name__ == "__main__":
    key = jax.random.PRNGKey(0)

    # Case 1: small square image, H*W a multiple of 128 (no-pad fast path).
    H, W = 16, 16
    img = jax.random.normal(key, (1, H, W), dtype=jnp.float32)
    out = jax.block_until_ready(resize_channel_to_3(img))
    ref = jnp.broadcast_to(img[0][None, :, :], (3, H, W)).astype(jnp.float32)
    assert out.shape == (3, H, W)
    assert out.dtype == jnp.float32
    assert jnp.allclose(out, ref), "mismatch vs reference (16x16 f32)"

    # Case 2: non-multiple-of-128 pixel count exercises the padding path,
    # and a non-f32 input dtype exercises the in-kernel cast.
    H2, W2 = 24, 40
    img2 = (jax.random.uniform(key, (1, H2, W2)) * 255).astype(jnp.uint8)
    out2 = jax.block_until_ready(resize_channel_to_3(img2))
    ref2 = jnp.broadcast_to(img2[0][None, :, :], (3, H2, W2)).astype(jnp.float32)
    assert out2.shape == (3, H2, W2)
    assert out2.dtype == jnp.float32
    assert jnp.allclose(out2, ref2), "mismatch vs reference (24x40 uint8)"

    # Case 3: larger image exercising multiple sublane rows of the slab.
    H3, W3 = 64, 64
    img3 = jax.random.normal(key, (1, H3, W3), dtype=jnp.float32)
    out3 = jax.block_until_ready(resize_channel_to_3(img3))
    ref3 = jnp.broadcast_to(img3[0][None, :, :], (3, H3, W3)).astype(jnp.float32)
    assert out3.shape == (3, H3, W3)
    assert jnp.allclose(out3, ref3), "mismatch vs reference (64x64 f32)"

    print("KERNEL_OK")
</pallas_src>

<mosaic_0001>
module attributes {stable_mosaic.version = 11 : i64} {
  func.func @_replicate_kernel(%arg0: i32, %arg1: memref<8x128xf32, #tpu.memory_space<vmem>>, %arg2: memref<3x8x128xf32, #tpu.memory_space<vmem>>) attributes {dimension_semantics = [#tpu.dimension_semantics<parallel>], iteration_bounds = array<i64: 1>, scalar_prefetch = 0 : i64, scratch_operands = 0 : i64, tpu.core_type = #tpu.core_type<tc>, window_params = [{transform_indices = @transform_0, window_bounds = array<i64: 8, 128>}, {transform_indices = @transform_1, window_bounds = array<i64: 3, 8, 128>}]} {
    %c0 = arith.constant 0 : index
    %c0_0 = arith.constant 0 : index
    %0 = vector.load %arg1[%c0, %c0_0] : memref<8x128xf32, #tpu.memory_space<vmem>>, vector<8x128xf32>
    %1 = vector.shape_cast %0 : vector<8x128xf32> to vector<1x8x128xf32>
    %2 = vector.shape_cast %1 : vector<1x8x128xf32> to vector<1x8x128xf32>
    %3 = vector.broadcast %2 : vector<1x8x128xf32> to vector<3x8x128xf32>
    %c0_1 = arith.constant 0 : index
    %c0_2 = arith.constant 0 : index
    %c0_3 = arith.constant 0 : index
    %4 = vector.load %arg2[%c0_1, %c0_2, %c0_3] : memref<3x8x128xf32, #tpu.memory_space<vmem>>, vector<3x8x128xf32>
    tpu.vector_store %arg2[%c0_1, %c0_2, %c0_3], %3 {strides = array<i32>} : memref<3x8x128xf32, #tpu.memory_space<vmem>>, vector<3x8x128xf32>,
    return
  }
  func.func @transform_0(%arg0: i32) -> (i32, i32) {
    %c0_i32 = arith.constant 0 : i32
    %c0_i32_0 = arith.constant 0 : i32
    return %arg0, %c0_i32 : i32, i32
  }
  func.func @transform_1(%arg0: i32) -> (i32, i32, i32) {
    %c0_i32 = arith.constant 0 : i32
    %c0_i32_0 = arith.constant 0 : i32
    %c0_i32_1 = arith.constant 0 : i32
    return %c0_i32, %arg0, %c0_i32_0 : i32, i32, i32
  }
}

</mosaic_0001>

<llo_original>
// kernel: tpu_custom_call.1
$region0: #{tpu_custom_call.1}
  #allocation0 [shape = 'u32[]', space=smem, size = 0x4, offset = 0x4, fixed_abs, tag = 'smem constant byte address 0x4 - core index']
  #allocation1 [shape = 'u32[144,128]{1,0:T(1,128)}', space=vmem, size = 0x12000, scoped, tag = 'internal scratch']
  %s0 = inlined_call_operand.hbm [shape: f32[8,128], index: 0, kind: input, shape index: {}]
  %s1 = inlined_call_operand.hbm [shape: f32[3,8,128], index: 1, kind: output, shape index: {}]
  %s2 = sld [smem:[#allocation0]]
  $region18: #{tpu_custom_call.1} parent=0
    _
  %s4 = ssub.s32 1, %s2
  %s5 = scalar_select 0, %s4, %s2
  $region1: #{tpu_custom_call.1} parent=0
    #allocation2 [shape = 'u8[4096]{0}', space=vmem, size = 0x1000, scoped, tag = 'input window, operand 0, single buffered']
    #allocation3 [shape = 's32[1]{0}', space=sflag, size = 0x4, scoped, tag = 'scoped memory for tpu_custom_call.1']
    #allocation4 [shape = 's32[1]{0}', space=sflag, size = 0x4, scoped, tag = 'scoped memory for tpu_custom_call.1']
    #allocation5 [shape = 'u8[12288]{0}', space=vmem, size = 0x3000, scoped, tag = 'output window, operand 0, single buffered']
    %6 = vsyncpa [#allocation3], 0
    %7 = vsyncpa [#allocation4], 0
    // Predicated region
    $region2: #{tpu_custom_call.1} parent=1 // pred_check
      _
    $region3: #{tpu_custom_call.1} parent=1 // pred_check_branch
      %9 = sbr.rel (0) target = $region5
    $region4: #{tpu_custom_call.1} parent=1 // pred_region
      %s11 = ssub.s32 128, 128
      %12 = vsyncadd [#allocation3], %s11
      %s14 = sshll.u32 [#allocation2], 4
      %s15 = int_to_ptr.vmem [resolvable:$true] %s14
      %17 = dma.hbm_to_vmem [thread:$0]  %s0, 128, %s15, [#allocation3]
    $region5: #{tpu_custom_call.1} parent=1 // pred_fallthru
      _
    // Predicated region
    $region6: #{tpu_custom_call.1} parent=1 // pred_check
      _
    $region7: #{tpu_custom_call.1} parent=1 // pred_check_branch
      %19 = sbr.rel (0) target = $region9
    $region8: #{tpu_custom_call.1} parent=1 // pred_region
      %20 = dma.done [#allocation3], 128
    $region9: #{tpu_custom_call.1} parent=1 // pred_fallthru
      _
    %v21 = vld [vmem:[#allocation2] sm:$0xff]
    %22 = vst [vmem:[#allocation5] sm:$0xff] %v21
    %23 = vst [vmem:[#allocation5 + $0x8] sm:$0xff] %v21
    %24 = vst [vmem:[#allocation5 + $0x10] sm:$0xff] %v21
    // Predicated region
    $region10: #{tpu_custom_call.1} parent=1 // pred_check
      _
    $region11: #{tpu_custom_call.1} parent=1 // pred_check_branch
      %26 = sbr.rel (0) target = $region13
    $region12: #{tpu_custom_call.1} parent=1 // pred_region
      %s28 = ssub.s32 384, 384
      %29 = vsyncadd [#allocation4], %s28
      %s30 = sshll.u32 [#allocation5], 4
      %s31 = int_to_ptr.vmem [resolvable:$true] %s30
      %36 = dma.vmem_to_hbm [thread:$0]  %s31, 384, %s1, [#allocation4], 128, 128, 8
    $region13: #{tpu_custom_call.1} parent=1 // pred_fallthru
      _
    // Predicated region
    $region14: #{tpu_custom_call.1} parent=1 // pred_check
      _
    $region15: #{tpu_custom_call.1} parent=1 // pred_check_branch
      %38 = sbr.rel (0) target = $region17
    $region16: #{tpu_custom_call.1} parent=1 // pred_region
      %39 = dma.done [#allocation4], 384
    $region17: #{tpu_custom_call.1} parent=1 // pred_fallthru
      _
    %40 = vsyncpa [#allocation3], 1
    %41 = vsyncpa [#allocation4], 1

</llo_original>
